<compile_context>
chip_gen: v6e
topology: v6e:2x2x1
jax: 0.10.0
libtpu: 0.0.40
codegen_flags: <defaults>
</compile_context>

<pallas_src>
import functools

import jax
import jax.numpy as jnp
from jax import lax
from jax.experimental import pallas as pl
from jax.experimental.pallas import tpu as pltpu

LEAKY_SLOPE = 0.01                 # nn.LeakyReLU() default negative_slope
BN_EPS = 1e-5                      # nn.BatchNorm1d default eps
LANE = 128                         # TPU lane width


def _round_up(a, m):
    return (a + m - 1) // m * m


def _hw_config():
    """Generation-aware defaults: (vmem_budget_bytes, feature_tile, max_batch_tile)."""
    kind = ""
    try:
        kind = jax.devices()[0].device_kind.lower()
    except Exception:
        pass
    vmem_cap = None
    try:
        vmem_cap = int(pltpu.get_tpu_info().vmem_capacity_bytes)
    except Exception:
        vmem_cap = None
    if vmem_cap is None:
        vmem_cap = (64 if "v7" in kind else 128) * 1024 * 1024
    # ~3/4 of physical VMEM, capped: ~48 MiB on v7x (64 MiB/TC), ~96 MiB on v5e/v6e.
    vmem_budget = min((vmem_cap * 3) // 4, 100 * 1024 * 1024)
    wide_mxu = ("v6" in kind) or ("v7" in kind)      # 2x256x256 MXU generations
    tn_default = 256 if wide_mxu else 128
    tm_max_default = 512 if "v7" in kind else 1024
    return vmem_budget, tn_default, tm_max_default


def _linear_lrelu(x_ref, w_ref, bias, compute_dtype):
    """(tm,K) @ (K,tn) on the MXU (f32 accumulate) + bias + LeakyReLU in f32."""
    h = jnp.dot(x_ref[...].astype(compute_dtype), w_ref[...].astype(compute_dtype),
                preferred_element_type=jnp.float32)
    h = h + bias
    return jnp.where(h >= 0.0, h, LEAKY_SLOPE * h)


def _stats_kernel(x_ref, w_ref, p_ref, *rest, feat_axis, batch_axis, n_valid,
                  n_pad, compute_dtype, store_h):
    """Pass 1: accumulate per-feature sum / sum-of-squares of
    h = LeakyReLU(x @ W + b) over the batch tiles, then emit the folded
    BatchNorm scale/shift for this feature tile (optionally also spilling h)."""
    if store_h:
        ss_ref, h_ref, sum_acc, sq_acc = rest
    else:
        ss_ref, sum_acc, sq_acc = rest
        h_ref = None

    j = pl.program_id(feat_axis)          # feature-tile index
    i = pl.program_id(batch_axis)         # batch-tile index (reduction)

    bias = p_ref[0:1, :]                  # (1, tn) f32
    h = _linear_lrelu(x_ref, w_ref, bias, compute_dtype)        # (tm, tn) f32
    if store_h:
        h_ref[...] = h.astype(h_ref.dtype)

    part_sum = jnp.sum(h, axis=0, keepdims=True)
    part_sq = jnp.sum(h * h, axis=0, keepdims=True)

    @pl.when(i == 0)
    def _init():
        sum_acc[j] = part_sum
        sq_acc[j] = part_sq

    @pl.when(i != 0)
    def _accumulate():
        sum_acc[j] = sum_acc[j] + part_sum
        sq_acc[j] = sq_acc[j] + part_sq

    @pl.when(i == pl.num_programs(batch_axis) - 1)
    def _finalize():
        s = sum_acc[j]
        q = sq_acc[j]
        if n_pad != n_valid:
            # Padded x rows are all-zero, so each contributes exactly
            # LeakyReLU(bias); subtract their contribution once here instead of
            # masking every batch tile (saves tm*tn VPU work per grid step).
            hb = jnp.where(bias >= 0.0, bias, LEAKY_SLOPE * bias)
            pad_rows = float(n_pad - n_valid)
            s = s - pad_rows * hb
            q = q - pad_rows * (hb * hb)
        inv_n = 1.0 / float(n_valid)       # compile-time constant
        mean = s * inv_n
        # Single-sweep variance; f32 accumulation + clamp guards cancellation.
        var = jnp.maximum(q * inv_n - mean * mean, 0.0)
        scale = p_ref[1:2, :] * lax.rsqrt(var + BN_EPS)          # gamma * rsqrt
        ss_ref[0:1, :] = scale
        ss_ref[1:2, :] = p_ref[2:3, :] - mean * scale            # beta - mean*scale


def _apply_recompute_kernel(x_ref, w_ref, p_ref, ss_ref, o_ref, *, compute_dtype):
    """Pass 2 (small K): recompute h for this tile, apply folded BN affine."""
    h = _linear_lrelu(x_ref, w_ref, p_ref[0:1, :], compute_dtype)
    o_ref[...] = (h * ss_ref[0:1, :] + ss_ref[1:2, :]).astype(o_ref.dtype)


def _apply_stored_kernel(h_ref, ss_ref, o_ref):
    """Pass 2 (large K): pure scale/shift FMA over the h spilled by pass 1."""
    h = h_ref[...].astype(jnp.float32)
    o_ref[...] = (h * ss_ref[0:1, :] + ss_ref[1:2, :]).astype(o_ref.dtype)


def block_forward(x, w, b, gamma, beta, *, tn=None, tm_max=None,
                  compute_dtype=jnp.bfloat16, out_dtype=jnp.float32,
                  store_h=None):
    """Forward of Block: BatchNorm1d(LeakyReLU(x @ W + b)) with training-mode
    batch statistics (biased variance, eps=1e-5), like a fresh nn.Module call.
    x: (N, in), w: (in, out), b/gamma/beta: (1, out) -> (N, out) `out_dtype`.
    Use compute_dtype=jnp.float32 for strict f32 parity with PyTorch; out_dtype
    may be set to bf16 if the consumer tolerates it (halves output HBM writes)."""
    N, K = x.shape
    Kw, F = w.shape
    assert Kw == K

    vmem_budget, tn_default, tm_max_default = _hw_config()
    tn = tn_default if tn is None else tn
    tm_max = tm_max_default if tm_max is None else tm_max
    assert tn % LANE == 0

    # Feature tile: full MXU width (256 on v6e/v7x, 128 on v5e) unless the wide
    # tile would inflate column padding by half a tile or more.
    tn = max(LANE, min(tn, _round_up(F, LANE)))
    while tn > LANE and _round_up(F, tn) - _round_up(F, LANE) >= tn // 2:
        tn //= 2
    F_pad = _round_up(F, tn)
    K_pad = _round_up(K, LANE)
    ft = F_pad // tn

    if store_h is None:
        # For large in_features, recomputing the matmul in pass 2 costs more MXU
        # FLOPs + x/W HBM reads than spilling h once (f32) and re-reading it.
        store_h = K_pad >= 512

    cbytes = jnp.dtype(compute_dtype).itemsize
    obytes = jnp.dtype(out_dtype).itemsize
    # Operands are only padded/cast in the wrapper when padding is unavoidable;
    # otherwise they are passed through untouched and cast tile-wise in-kernel.
    xe = cbytes if K_pad != K else jnp.dtype(x.dtype).itemsize
    we = cbytes if (K_pad != K or F_pad != F) else jnp.dtype(w.dtype).itemsize

    # Batch tile: multiple of 16 sublanes (bf16 packing), capped by tm_max and
    # shrunk until the double-buffered working set of the heavier pass fits.
    tm = max(16, (min(tm_max, _round_up(N, 16)) // 16) * 16)

    def working_set(tm_):
        vec = 8 * tn * 4                        # (3,tn)/(2,tn) pad to 8 sublanes
        p1 = tm_ * K_pad * xe + K_pad * tn * we + 2 * vec
        if store_h:
            p1 += tm_ * tn * 4                  # h tile written by pass 1
            p2 = tm_ * tn * 4 + vec + tm_ * tn * obytes
        else:
            p2 = tm_ * K_pad * xe + K_pad * tn * we + 2 * vec + tm_ * tn * obytes
        return 2 * max(p1, p2) + 2 * ft * 8 * tn * 4   # dbl-buffer + stats scratch

    # TODO: for very large in_features a K-reduction grid axis would keep tm
    # large instead of shrinking it here.
    while working_set(tm) > vmem_budget and tm > 16:
        tm = max(16, _round_up(tm // 2, 16))
    n_pad = _round_up(N, tm)
    bt = n_pad // tm

    # Pad (casting to the MXU dtype while copying) only when required.
    if K_pad != K:
        xp = jnp.pad(x.astype(compute_dtype), ((0, n_pad - N), (0, K_pad - K)))
    elif n_pad != N:
        xp = jnp.pad(x, ((0, n_pad - N), (0, 0)))
    else:
        xp = x
    if K_pad != K or F_pad != F:
        wp = jnp.pad(w.astype(compute_dtype), ((0, K_pad - K), (0, F_pad - F)))
    else:
        wp = w

    # bias/gamma/beta stacked into one lane-dense (3, F_pad) operand: one small
    # DMA per feature tile instead of three.
    params = jnp.concatenate(
        [b.reshape(1, F), gamma.reshape(1, F), beta.reshape(1, F)], axis=0
    ).astype(jnp.float32)
    if F_pad != F:
        params = jnp.pad(params, ((0, 0), (0, F_pad - F)))

    # Grid nesting by operand size: load the bigger of x / W from HBM once and
    # re-stream the smaller one.
    batch_outer = (ft - 1) * (n_pad * K_pad * xe) > (bt - 1) * (K_pad * F_pad * we)
    if batch_outer:
        grid = (bt, ft)
        batch_axis, feat_axis = 0, 1
        x_map = lambda i, j: (i, 0)
        w_map = lambda i, j: (0, j)
        vec_map = lambda i, j: (0, j)
        tile_map = lambda i, j: (i, j)
        # Conservative: keep trailing feature axis "arbitrary" when the
        # reduction axis leads (parallel-leading is the supported convention).
        p1_sem = ("arbitrary", "arbitrary")
    else:
        grid = (ft, bt)
        batch_axis, feat_axis = 1, 0
        x_map = lambda j, i: (i, 0)
        w_map = lambda j, i: (0, j)
        vec_map = lambda j, i: (0, j)
        tile_map = lambda j, i: (i, j)
        p1_sem = ("parallel", "arbitrary")

    x_spec = pl.BlockSpec((tm, K_pad), x_map)
    w_spec = pl.BlockSpec((K_pad, tn), w_map)
    p_spec = pl.BlockSpec((3, tn), vec_map)
    ss_spec = pl.BlockSpec((2, tn), vec_map)
    tile_spec = pl.BlockSpec((tm, tn), tile_map)

    # ---- Pass 1: per-feature batch statistics -> folded BN scale/shift. ----
    stats = functools.partial(
        _stats_kernel, feat_axis=feat_axis, batch_axis=batch_axis, n_valid=N,
        n_pad=n_pad, compute_dtype=compute_dtype, store_h=store_h)
    out_shapes = [jax.ShapeDtypeStruct((2, F_pad), jnp.float32)]
    out_specs = [ss_spec]
    if store_h:
        out_shapes.append(jax.ShapeDtypeStruct((n_pad, F_pad), jnp.float32))
        out_specs.append(tile_spec)

    p1 = pl.pallas_call(
        stats,
        out_shape=tuple(out_shapes),
        grid_spec=pltpu.PrefetchScalarGridSpec(
            num_scalar_prefetch=0,
            grid=grid,
            in_specs=[x_spec, w_spec, p_spec],
            out_specs=tuple(out_specs),
            scratch_shapes=[pltpu.VMEM((ft, 1, tn), jnp.float32),
                            pltpu.VMEM((ft, 1, tn), jnp.float32)]),
        compiler_params=pltpu.CompilerParams(
            dimension_semantics=p1_sem,
            vmem_limit_bytes=vmem_budget),
    )(xp, wp, params)
    if store_h:
        scale_shift, h_full = p1
    else:
        scale_shift = p1[0] if isinstance(p1, (tuple, list)) else p1
        h_full = None

    # ---- Pass 2: lane-dense, fully parallel tiles applying h*scale + shift. --
    if store_h:
        kernel2 = _apply_stored_kernel
        operands = (h_full, scale_shift)
        in_specs2 = [tile_spec, ss_spec]
    else:
        kernel2 = functools.partial(_apply_recompute_kernel,
                                    compute_dtype=compute_dtype)
        operands = (xp, wp, params, scale_shift)
        in_specs2 = [x_spec, w_spec, p_spec, ss_spec]

    out_p = pl.pallas_call(
        kernel2,
        out_shape=jax.ShapeDtypeStruct((n_pad, F_pad), out_dtype),
        grid_spec=pltpu.PrefetchScalarGridSpec(
            num_scalar_prefetch=0,
            grid=grid,
            in_specs=in_specs2,
            out_specs=tile_spec),
        compiler_params=pltpu.CompilerParams(
            dimension_semantics=("parallel", "parallel"),
            vmem_limit_bytes=vmem_budget),
    )(*operands)

    if n_pad != N or F_pad != F:
        out_p = out_p[:N, :F]
    return out_p


def reference_forward(x, w, b, gamma, beta, matmul_dtype=jnp.float32):
    """Pure-JAX reference mirroring nn.Sequential(Linear, LeakyReLU,
    BatchNorm1d) in training mode; matmul_dtype selects matmul operand
    precision so the bf16-MXU fast path can be checked tightly."""
    h = jnp.dot(x.astype(matmul_dtype), w.astype(matmul_dtype),
                preferred_element_type=jnp.float32)
    h = h + b.reshape(1, -1).astype(jnp.float32)
    h = jnp.where(h >= 0.0, h, LEAKY_SLOPE * h)
    mean = jnp.mean(h, axis=0, keepdims=True)
    var = jnp.mean((h - mean) ** 2, axis=0, keepdims=True)
    h_hat = (h - mean) * lax.rsqrt(var + BN_EPS)
    return h_hat * gamma.reshape(1, -1) + beta.reshape(1, -1)


if __name__ == "__main__":
    # Small shapes consistent with the module: Block(input_size=32, output_size=16)
    batch, input_size, output_size = 8, 32, 16

    key = jax.random.PRNGKey(0)
    kx, kw, kb = jax.random.split(key, 3)

    x = jax.random.normal(kx, (batch, input_size), dtype=jnp.float32)
    bound = 1.0 / (input_size ** 0.5)          # PyTorch Linear default init range
    w = jax.random.uniform(kw, (input_size, output_size),
                           minval=-bound, maxval=bound, dtype=jnp.float32)
    b = jax.random.uniform(kb, (1, output_size),
                           minval=-bound, maxval=bound, dtype=jnp.float32)
    gamma = jnp.ones((1, output_size), jnp.float32)   # BatchNorm1d affine defaults
    beta = jnp.zeros((1, output_size), jnp.float32)

    # Fast path: bf16 operands into the MXU, f32 accumulate + f32 epilogue.
    y = jax.block_until_ready(block_forward(x, w, b, gamma, beta))
    y_ref = reference_forward(x, w, b, gamma, beta, matmul_dtype=jnp.bfloat16)
    assert y.shape == (batch, output_size)
    assert jnp.allclose(y, y_ref, atol=1e-3, rtol=1e-3), "bf16 path mismatch"

    # Strict f32 parity path (matches the PyTorch module up to f32 rounding).
    y32 = jax.block_until_ready(
        block_forward(x, w, b, gamma, beta, compute_dtype=jnp.float32))
    y32_ref = reference_forward(x, w, b, gamma, beta, matmul_dtype=jnp.float32)
    assert jnp.allclose(y32, y32_ref, atol=1e-4, rtol=1e-4), "f32 path mismatch"

    # Multi-tile: several batch tiles, padded rows/columns, recompute path.
    N2, K2, F2 = 100, 40, 200
    k1, k2, k3, k4, k5 = jax.random.split(jax.random.PRNGKey(1), 5)
    x2 = jax.random.normal(k1, (N2, K2), jnp.float32)
    w2 = jax.random.normal(k2, (K2, F2), jnp.float32) * 0.1
    b2 = jax.random.normal(k3, (1, F2), jnp.float32) * 0.1
    g2 = jax.random.normal(k4, (1, F2), jnp.float32) * 0.5 + 1.0
    be2 = jax.random.normal(k5, (1, F2), jnp.float32) * 0.5
    y2 = jax.block_until_ready(block_forward(x2, w2, b2, g2, be2, tm_max=32))
    y2_ref = reference_forward(x2, w2, b2, g2, be2, matmul_dtype=jnp.bfloat16)
    assert y2.shape == (N2, F2)
    assert jnp.allclose(y2, y2_ref, atol=1e-3, rtol=1e-3), "tiled path mismatch"

    # Large in_features: store-h path + batch-outer grid (x loaded from HBM once).
    N3, K3, F3 = 64, 640, 384
    q1, q2, q3, q4, q5 = jax.random.split(jax.random.PRNGKey(2), 5)
    x3 = jax.random.normal(q1, (N3, K3), jnp.float32)
    w3 = jax.random.normal(q2, (K3, F3), jnp.float32) * 0.05
    b3 = jax.random.normal(q3, (1, F3), jnp.float32) * 0.1
    g3 = jax.random.normal(q4, (1, F3), jnp.float32) * 0.5 + 1.0
    be3 = jax.random.normal(q5, (1, F3), jnp.float32) * 0.5
    y3 = jax.block_until_ready(block_forward(x3, w3, b3, g3, be3))
    y3_ref = reference_forward(x3, w3, b3, g3, be3, matmul_dtype=jnp.bfloat16)
    assert y3.shape == (N3, F3)
    assert jnp.allclose(y3, y3_ref, atol=1e-3, rtol=1e-3), "store-h path mismatch"

    print("KERNEL_OK")
</pallas_src>

<mosaic_0001>
module attributes {stable_mosaic.version = 11 : i64} {
  func.func @_stats_kernel(%arg0: i32, %arg1: i32, %arg2: memref<16x128xbf16, #tpu.memory_space<vmem>>, %arg3: memref<128x128xbf16, #tpu.memory_space<vmem>>, %arg4: memref<3x128xf32, #tpu.memory_space<vmem>>, %arg5: memref<2x128xf32, #tpu.memory_space<vmem>>, %arg6: memref<1x1x128xf32, #tpu.memory_space<vmem>>, %arg7: memref<1x1x128xf32, #tpu.memory_space<vmem>>) attributes {dimension_semantics = [#tpu.dimension_semantics<parallel>, #tpu.dimension_semantics<arbitrary>], iteration_bounds = array<i64: 1, 1>, scalar_prefetch = 0 : i64, scratch_operands = 2 : i64, tpu.core_type = #tpu.core_type<tc>, window_params = [{transform_indices = @transform_0, window_bounds = array<i64: 16, 128>}, {transform_indices = @transform_1, window_bounds = array<i64: 128, 128>}, {transform_indices = @transform_2, window_bounds = array<i64: 3, 128>}, {transform_indices = @transform_3, window_bounds = array<i64: 2, 128>}]} {
    %c0 = arith.constant 0 : index
    %c0_0 = arith.constant 0 : index
    %0 = vector.load %arg4[%c0, %c0_0] : memref<3x128xf32, #tpu.memory_space<vmem>>, vector<1x128xf32>
    %c0_1 = arith.constant 0 : index
    %c0_2 = arith.constant 0 : index
    %1 = vector.load %arg2[%c0_1, %c0_2] : memref<16x128xbf16, #tpu.memory_space<vmem>>, vector<16x128xbf16>
    %c0_3 = arith.constant 0 : index
    %c0_4 = arith.constant 0 : index
    %2 = vector.load %arg3[%c0_3, %c0_4] : memref<128x128xbf16, #tpu.memory_space<vmem>>, vector<128x128xbf16>
    %cst = arith.constant dense<0.000000e+00> : vector<16x128xf32>
    %3 = tpu.matmul %1, %2, %cst {dimension_numbers = #tpu.dot_dimension_numbers<[1], [0], [0], [1], [0, 0, 1, 1], [], []>} : vector<16x128xbf16>, vector<128x128xbf16>, vector<16x128xf32> -> vector<16x128xf32>
    %4 = vector.broadcast %0 : vector<1x128xf32> to vector<16x128xf32>
    %5 = arith.addf %3, %4 : vector<16x128xf32>
    %cst_5 = arith.constant 0.000000e+00 : f32
    %6 = vector.broadcast %cst_5 : f32 to vector<16x128xf32>
    %7 = arith.cmpf oge, %5, %6 : vector<16x128xf32>
    %cst_6 = arith.constant 0.00999999977 : f32
    %8 = vector.broadcast %cst_6 : f32 to vector<16x128xf32>
    %9 = arith.mulf %8, %5 : vector<16x128xf32>
    %10 = arith.select %7, %5, %9 : vector<16x128xi1>, vector<16x128xf32>
    %cst_7 = arith.constant dense<0.000000e+00> : vector<128xf32>
    %11 = vector.multi_reduction <add>, %10, %cst_7 [0] : vector<16x128xf32> to vector<128xf32>
    %12 = vector.shape_cast %11 : vector<128xf32> to vector<1x128xf32>
    %13 = arith.mulf %10, %10 : vector<16x128xf32>
    %cst_8 = arith.constant dense<0.000000e+00> : vector<128xf32>
    %14 = vector.multi_reduction <add>, %13, %cst_8 [0] : vector<16x128xf32> to vector<128xf32>
    %15 = vector.shape_cast %14 : vector<128xf32> to vector<1x128xf32>
    %c0_i32 = arith.constant 0 : i32
    %16 = arith.cmpi eq, %arg1, %c0_i32 : i32
    %17 = arith.extui %16 : i1 to i32
    %c0_i32_9 = arith.constant 0 : i32
    %18 = arith.cmpi ne, %17, %c0_i32_9 : i32
    scf.if %18 {
      %25 = arith.index_cast %arg0 : i32 to index
      %c0_14 = arith.constant 0 : index
      %c0_15 = arith.constant 0 : index
      %26 = vector.load %arg6[%25, %c0_14, %c0_15] : memref<1x1x128xf32, #tpu.memory_space<vmem>>, vector<1x1x128xf32>
      %27 = vector.shape_cast %26 : vector<1x1x128xf32> to vector<1x128xf32>
      %28 = vector.shape_cast %12 : vector<1x128xf32> to vector<1x1x128xf32>
      tpu.vector_store %arg6[%25, %c0_14, %c0_15], %28 {strides = array<i32>} : memref<1x1x128xf32, #tpu.memory_space<vmem>>, vector<1x1x128xf32>,
      %29 = arith.index_cast %arg0 : i32 to index
      %c0_16 = arith.constant 0 : index
      %c0_17 = arith.constant 0 : index
      %30 = vector.load %arg7[%29, %c0_16, %c0_17] : memref<1x1x128xf32, #tpu.memory_space<vmem>>, vector<1x1x128xf32>
      %31 = vector.shape_cast %30 : vector<1x1x128xf32> to vector<1x128xf32>
      %32 = vector.shape_cast %15 : vector<1x128xf32> to vector<1x1x128xf32>
      tpu.vector_store %arg7[%29, %c0_16, %c0_17], %32 {strides = array<i32>} : memref<1x1x128xf32, #tpu.memory_space<vmem>>, vector<1x1x128xf32>,
    } else {
    }
    %c0_i32_10 = arith.constant 0 : i32
    %19 = arith.cmpi ne, %arg1, %c0_i32_10 : i32
    %20 = arith.extui %19 : i1 to i32
    %c0_i32_11 = arith.constant 0 : i32
    %21 = arith.cmpi ne, %20, %c0_i32_11 : i32
    scf.if %21 {
      %25 = arith.index_cast %arg0 : i32 to index
      %c0_14 = arith.constant 0 : index
      %c0_15 = arith.constant 0 : index
      %26 = vector.load %arg6[%25, %c0_14, %c0_15] : memref<1x1x128xf32, #tpu.memory_space<vmem>>, vector<1x1x128xf32>
      %27 = vector.shape_cast %26 : vector<1x1x128xf32> to vector<1x128xf32>
      %28 = arith.addf %27, %12 : vector<1x128xf32>
      %29 = arith.index_cast %arg0 : i32 to index
      %c0_16 = arith.constant 0 : index
      %c0_17 = arith.constant 0 : index
      %30 = vector.load %arg6[%29, %c0_16, %c0_17] : memref<1x1x128xf32, #tpu.memory_space<vmem>>, vector<1x1x128xf32>
      %31 = vector.shape_cast %30 : vector<1x1x128xf32> to vector<1x128xf32>
      %32 = vector.shape_cast %28 : vector<1x128xf32> to vector<1x1x128xf32>
      tpu.vector_store %arg6[%29, %c0_16, %c0_17], %32 {strides = array<i32>} : memref<1x1x128xf32, #tpu.memory_space<vmem>>, vector<1x1x128xf32>,
      %33 = arith.index_cast %arg0 : i32 to index
      %c0_18 = arith.constant 0 : index
      %c0_19 = arith.constant 0 : index
      %34 = vector.load %arg7[%33, %c0_18, %c0_19] : memref<1x1x128xf32, #tpu.memory_space<vmem>>, vector<1x1x128xf32>
      %35 = vector.shape_cast %34 : vector<1x1x128xf32> to vector<1x128xf32>
      %36 = arith.addf %35, %15 : vector<1x128xf32>
      %37 = arith.index_cast %arg0 : i32 to index
      %c0_20 = arith.constant 0 : index
      %c0_21 = arith.constant 0 : index
      %38 = vector.load %arg7[%37, %c0_20, %c0_21] : memref<1x1x128xf32, #tpu.memory_space<vmem>>, vector<1x1x128xf32>
      %39 = vector.shape_cast %38 : vector<1x1x128xf32> to vector<1x128xf32>
      %40 = vector.shape_cast %36 : vector<1x128xf32> to vector<1x1x128xf32>
      tpu.vector_store %arg7[%37, %c0_20, %c0_21], %40 {strides = array<i32>} : memref<1x1x128xf32, #tpu.memory_space<vmem>>, vector<1x1x128xf32>,
    } else {
    }
    %c0_i32_12 = arith.constant 0 : i32
    %22 = arith.cmpi eq, %arg1, %c0_i32_12 : i32
    %23 = arith.extui %22 : i1 to i32
    %c0_i32_13 = arith.constant 0 : i32
    %24 = arith.cmpi ne, %23, %c0_i32_13 : i32
    scf.if %24 {
      %25 = arith.index_cast %arg0 : i32 to index
      %c0_14 = arith.constant 0 : index
      %c0_15 = arith.constant 0 : index
      %26 = vector.load %arg6[%25, %c0_14, %c0_15] : memref<1x1x128xf32, #tpu.memory_space<vmem>>, vector<1x1x128xf32>
      %27 = vector.shape_cast %26 : vector<1x1x128xf32> to vector<1x128xf32>
      %28 = arith.index_cast %arg0 : i32 to index
      %c0_16 = arith.constant 0 : index
      %c0_17 = arith.constant 0 : index
      %29 = vector.load %arg7[%28, %c0_16, %c0_17] : memref<1x1x128xf32, #tpu.memory_space<vmem>>, vector<1x1x128xf32>
      %30 = vector.shape_cast %29 : vector<1x1x128xf32> to vector<1x128xf32>
      %cst_18 = arith.constant 0.000000e+00 : f32
      %31 = vector.broadcast %cst_18 : f32 to vector<1x128xf32>
      %32 = arith.cmpf oge, %0, %31 : vector<1x128xf32>
      %cst_19 = arith.constant 0.00999999977 : f32
      %33 = vector.broadcast %cst_19 : f32 to vector<1x128xf32>
      %34 = arith.mulf %33, %0 : vector<1x128xf32>
      %35 = arith.select %32, %0, %34 : vector<1x128xi1>, vector<1x128xf32>
      %cst_20 = arith.constant 8.000000e+00 : f32
      %36 = vector.broadcast %cst_20 : f32 to vector<1x128xf32>
      %37 = arith.mulf %36, %35 : vector<1x128xf32>
      %38 = arith.subf %27, %37 : vector<1x128xf32>
      %39 = arith.mulf %35, %35 : vector<1x128xf32>
      %cst_21 = arith.constant 8.000000e+00 : f32
      %40 = vector.broadcast %cst_21 : f32 to vector<1x128xf32>
      %41 = arith.mulf %40, %39 : vector<1x128xf32>
      %42 = arith.subf %30, %41 : vector<1x128xf32>
      %cst_22 = arith.constant 1.250000e-01 : f32
      %43 = vector.broadcast %cst_22 : f32 to vector<1x128xf32>
      %44 = arith.mulf %38, %43 : vector<1x128xf32>
      %cst_23 = arith.constant 1.250000e-01 : f32
      %45 = vector.broadcast %cst_23 : f32 to vector<1x128xf32>
      %46 = arith.mulf %42, %45 : vector<1x128xf32>
      %47 = arith.mulf %44, %44 : vector<1x128xf32>
      %48 = arith.subf %46, %47 : vector<1x128xf32>
      %cst_24 = arith.constant 0.000000e+00 : f32
      %49 = vector.broadcast %cst_24 : f32 to vector<1x128xf32>
      %50 = arith.maximumf %48, %49 : vector<1x128xf32>
      %c1 = arith.constant 1 : index
      %c0_25 = arith.constant 0 : index
      %51 = vector.load %arg4[%c1, %c0_25] : memref<3x128xf32, #tpu.memory_space<vmem>>, vector<1x128xf32>
      %cst_26 = arith.constant 9.99999974E-6 : f32
      %52 = vector.broadcast %cst_26 : f32 to vector<1x128xf32>
      %53 = arith.addf %50, %52 : vector<1x128xf32>
      %54 = math.rsqrt %53 : vector<1x128xf32>
      %55 = arith.mulf %51, %54 : vector<1x128xf32>
      %c0_27 = arith.constant 0 : index
      %c0_28 = arith.constant 0 : index
      %56 = vector.load %arg5[%c0_27, %c0_28] : memref<2x128xf32, #tpu.memory_space<vmem>>, vector<1x128xf32>
      tpu.vector_store %arg5[%c0_27, %c0_28], %55 {strides = array<i32>} : memref<2x128xf32, #tpu.memory_space<vmem>>, vector<1x128xf32>,
      %c2 = arith.constant 2 : index
      %c0_29 = arith.constant 0 : index
      %57 = vector.load %arg4[%c2, %c0_29] : memref<3x128xf32, #tpu.memory_space<vmem>>, vector<1x128xf32>
      %58 = arith.mulf %44, %55 : vector<1x128xf32>
      %59 = arith.subf %57, %58 : vector<1x128xf32>
      %c1_30 = arith.constant 1 : index
      %c0_31 = arith.constant 0 : index
      %60 = vector.load %arg5[%c1_30, %c0_31] : memref<2x128xf32, #tpu.memory_space<vmem>>, vector<1x128xf32>
      tpu.vector_store %arg5[%c1_30, %c0_31], %59 {strides = array<i32>} : memref<2x128xf32, #tpu.memory_space<vmem>>, vector<1x128xf32>,
    } else {
    }
    return
  }
  func.func @transform_0(%arg0: i32, %arg1: i32) -> (i32, i32) {
    %c0_i32 = arith.constant 0 : i32
    %c0_i32_0 = arith.constant 0 : i32
    return %arg1, %c0_i32 : i32, i32
  }
  func.func @transform_1(%arg0: i32, %arg1: i32) -> (i32, i32) {
    %c0_i32 = arith.constant 0 : i32
    %c0_i32_0 = arith.constant 0 : i32
    return %c0_i32, %arg0 : i32, i32
  }
  func.func @transform_2(%arg0: i32, %arg1: i32) -> (i32, i32) {
    %c0_i32 = arith.constant 0 : i32
    %c0_i32_0 = arith.constant 0 : i32
    return %c0_i32, %arg0 : i32, i32
  }
  func.func @transform_3(%arg0: i32, %arg1: i32) -> (i32, i32) {
    %c0_i32 = arith.constant 0 : i32
    %c0_i32_0 = arith.constant 0 : i32
    return %c0_i32, %arg0 : i32, i32
  }
}

</mosaic_0001>

<llo_original>
// kernel: tpu_custom_call.1
$region0: #{tpu_custom_call.1}
  #allocation0 [shape = 'u32[]', space=smem, size = 0x4, offset = 0x4, fixed_abs, tag = 'smem constant byte address 0x4 - core index']
  #allocation1 [shape = 'u32[144,128]{1,0:T(1,128)}', space=vmem, size = 0x12000, scoped, tag = 'internal scratch']
  #allocation2 [shape = 'f32[1,1,128]{2,1,0:T(1,128)}', space=vmem, size = 0x200, scoped, tag = 'scratch operand']
  #allocation3 [shape = 'f32[1,1,128]{2,1,0:T(1,128)}', space=vmem, size = 0x200, scoped, tag = 'scratch operand']
  %s0 = inlined_call_operand.hbm [shape: bf16[16,128], index: 0, kind: input, shape index: {}]
  %s1 = inlined_call_operand.hbm [shape: bf16[128,128], index: 1, kind: input, shape index: {}]
  %s2 = inlined_call_operand.hbm [shape: f32[3,128], index: 2, kind: input, shape index: {}]
  %s3 = inlined_call_operand.hbm [shape: f32[2,128], index: 3, kind: output, shape index: {}]
  %s4 = sld [smem:[#allocation0]]
  $region46: #{tpu_custom_call.1} parent=0
    _
  %s6 = ssub.s32 1, %s4
  %s7 = scalar_select 0, %s6, %s4
  $region1: #{tpu_custom_call.1} parent=0
    #allocation4 [shape = 'u8[4096]{0}', space=vmem, size = 0x1000, scoped, tag = 'input window, operand 0, single buffered']
    #allocation5 [shape = 's32[1]{0}', space=sflag, size = 0x4, scoped, tag = 'scoped memory for tpu_custom_call.1']
    #allocation6 [shape = 's32[1]{0}', space=sflag, size = 0x4, scoped, tag = 'scoped memory for tpu_custom_call.1']
    #allocation7 [shape = 'u8[32768]{0}', space=vmem, size = 0x8000, scoped, tag = 'input window, operand 1, single buffered']
    #allocation8 [shape = 's32[1]{0}', space=sflag, size = 0x4, scoped, tag = 'scoped memory for tpu_custom_call.1']
    #allocation9 [shape = 'u8[2048]{0}', space=vmem, size = 0x800, scoped, tag = 'input window, operand 2, single buffered']
    #allocation10 [shape = 'u8[1024]{0}', space=vmem, size = 0x400, scoped, tag = 'output window, operand 0, single buffered']
    %8 = vsyncpa [#allocation5], 0
    %9 = vsyncpa [#allocation8], 0
    %10 = vsyncpa [#allocation6], 0
    // Predicated region
    $region2: #{tpu_custom_call.1} parent=1 // pred_check
      _
    $region3: #{tpu_custom_call.1} parent=1 // pred_check_branch
      %12 = sbr.rel (0) target = $region5
    $region4: #{tpu_custom_call.1} parent=1 // pred_region
      %s14 = ssub.s32 128, 128
      %15 = vsyncadd [#allocation5], %s14
      %s16 = sshll.u32 [#allocation4], 4
      %s17 = int_to_ptr.vmem [resolvable:$true] %s16
      %22 = dma.hbm_to_vmem [thread:$0]  %s0, 128, %s17, [#allocation5], 64, 64, 4
    $region5: #{tpu_custom_call.1} parent=1 // pred_fallthru
      _
    // Predicated region
    $region6: #{tpu_custom_call.1} parent=1 // pred_check
      _
    $region7: #{tpu_custom_call.1} parent=1 // pred_check_branch
      %24 = sbr.rel (0) target = $region9
    $region8: #{tpu_custom_call.1} parent=1 // pred_region
      %s26 = ssub.s32 1024, 1024
      %27 = vsyncadd [#allocation8], %s26
      %s28 = sshll.u32 [#allocation7], 4
      %s29 = int_to_ptr.vmem [resolvable:$true] %s28
      %34 = dma.hbm_to_vmem [thread:$0]  %s1, 1024, %s29, [#allocation8], 64, 64, 4
    $region9: #{tpu_custom_call.1} parent=1 // pred_fallthru
      _
    // Predicated region
    $region10: #{tpu_custom_call.1} parent=1 // pred_check
      _
    $region11: #{tpu_custom_call.1} parent=1 // pred_check_branch
      %36 = sbr.rel (0) target = $region13
    $region12: #{tpu_custom_call.1} parent=1 // pred_region
      %s38 = ssub.s32 64, 64
      %39 = vsyncadd [#allocation8], %s38
      %s41 = sshll.u32 [#allocation9], 4
      %s42 = int_to_ptr.vmem [resolvable:$true] %s41
      %44 = dma.hbm_to_vmem [thread:$0]  %s2, 64, %s42, [#allocation8]
    $region13: #{tpu_custom_call.1} parent=1 // pred_fallthru
      _
    // Predicated region
    $region14: #{tpu_custom_call.1} parent=1 // pred_check
      _
    $region15: #{tpu_custom_call.1} parent=1 // pred_check_branch
      %46 = sbr.rel (0) target = $region17
    $region16: #{tpu_custom_call.1} parent=1 // pred_region
      %47 = dma.done [#allocation5], 128
    $region17: #{tpu_custom_call.1} parent=1 // pred_fallthru
      _
    // Predicated region
    $region18: #{tpu_custom_call.1} parent=1 // pred_check
      _
    $region19: #{tpu_custom_call.1} parent=1 // pred_check_branch
      %49 = sbr.rel (0) target = $region21
    $region20: #{tpu_custom_call.1} parent=1 // pred_region
      %50 = dma.done [#allocation8], 1024
    $region21: #{tpu_custom_call.1} parent=1 // pred_fallthru
      _
    // Predicated region
    $region22: #{tpu_custom_call.1} parent=1 // pred_check
      _
    $region23: #{tpu_custom_call.1} parent=1 // pred_check_branch
      %52 = sbr.rel (0) target = $region25
    $region24: #{tpu_custom_call.1} parent=1 // pred_region
      %53 = dma.done [#allocation8], 64
    $region25: #{tpu_custom_call.1} parent=1 // pred_fallthru
      _
    %v55 = vld [vmem:[#allocation9] sm:$0x1]
    %v56 = vld [vmem:[#allocation4] sm:$0xf]
    %v57 = vld [vmem:[#allocation4 + $0x4] sm:$0xf]
    %v58 = vld [vmem:[#allocation7] sm:$0xf]
    %v59 = vld [vmem:[#allocation7 + $0x4] sm:$0xf]
    %v60 = vld [vmem:[#allocation7 + $0x8] sm:$0xf]
    %v61 = vld [vmem:[#allocation7 + $0xc] sm:$0xf]
    %v62 = vld [vmem:[#allocation7 + $0x10] sm:$0xf]
    %v63 = vld [vmem:[#allocation7 + $0x14] sm:$0xf]
    %v64 = vld [vmem:[#allocation7 + $0x18] sm:$0xf]
    %v65 = vld [vmem:[#allocation7 + $0x1c] sm:$0xf]
    %v66 = vld [vmem:[#allocation7 + $0x20] sm:$0xf]
    %v67 = vld [vmem:[#allocation7 + $0x24] sm:$0xf]
    %v68 = vld [vmem:[#allocation7 + $0x28] sm:$0xf]
    %v69 = vld [vmem:[#allocation7 + $0x2c] sm:$0xf]
    %v70 = vld [vmem:[#allocation7 + $0x30] sm:$0xf]
    %v71 = vld [vmem:[#allocation7 + $0x34] sm:$0xf]
    %v72 = vld [vmem:[#allocation7 + $0x38] sm:$0xf]
    %v73 = vld [vmem:[#allocation7 + $0x3c] sm:$0xf]
    %v74 = vlaneseq
    %v75 = vshrl.u32 %v74, 7
    %v76 = vsub.s32 0, %v75
    %v77 = vrot.slane %v55, %v76
    %v80 = vunpack.c.l.b16 %v56
    %v81 = vunpack.c.l.b16 %v57
    %v82 = vpack.c.b16 %v81, %v80
    %v100 = vunpack.c.l.b16 %v58
    %v101 = vunpack.c.l.b16 %v59
    %v102 = vunpack.c.l.b16 %v60
    %v103 = vunpack.c.l.b16 %v61
    %v104 = vunpack.c.l.b16 %v62
    %v105 = vunpack.c.l.b16 %v63
    %v106 = vunpack.c.l.b16 %v64
    %v107 = vunpack.c.l.b16 %v65
    %v108 = vunpack.c.l.b16 %v66
    %v109 = vunpack.c.l.b16 %v67
    %v110 = vunpack.c.l.b16 %v68
    %v111 = vunpack.c.l.b16 %v69
    %v112 = vunpack.c.l.b16 %v70
    %v113 = vunpack.c.l.b16 %v71
    %v114 = vunpack.c.l.b16 %v72
    %v115 = vunpack.c.l.b16 %v73
    %v116 = vpack.c.b16 %v101, %v100
    %v117 = vpack.c.b16 %v103, %v102
    %v118 = vpack.c.b16 %v105, %v104
    %v119 = vpack.c.b16 %v107, %v106
    %v120 = vpack.c.b16 %v109, %v108
    %v121 = vpack.c.b16 %v111, %v110
    %v122 = vpack.c.b16 %v113, %v112
    %v123 = vpack.c.b16 %v115, %v114
    %132 = vmatprep.subr.bf16.mxu0 0
    %133 = vmatpush1.bf16.msra.mxu0 %v123
    %134 = vmatprep.subr.bf16.mxu0 0
    %135 = vmatpush1.bf16.msra.mxu0 %v122
    %136 = vmatprep.subr.bf16.mxu0 0
    %137 = vmatpush1.bf16.msra.mxu0 %v121
    %138 = vmatprep.subr.bf16.mxu0 0
    %139 = vmatpush1.bf16.msra.mxu0 %v120
    %140 = vmatprep.subr.bf16.mxu0 0
    %141 = vmatpush1.bf16.msra.mxu0 %v119
    %142 = vmatprep.subr.bf16.mxu0 0
    %143 = vmatpush1.bf16.msra.mxu0 %v118
    %144 = vmatprep.subr.bf16.mxu0 0
    %145 = vmatpush1.bf16.msra.mxu0 %v117
    %146 = vmatprep.subr.bf16.mxu0 0
    %147 = vmatpush1.bf16.msra.mxu0 %v116
    %148 = vmatprep.subr.bf16.mxu0 0
    %149 = vmatpush2.bf16.msra.mxu0 0
    %150 = vmatprep.subr.bf16.mxu0 0
    %151 = vmatpush2.bf16.msra.mxu0 0
    %152 = vmatprep.subr.bf16.mxu0 0
    %153 = vmatpush2.bf16.msra.mxu0 0
    %154 = vmatprep.subr.bf16.mxu0 0
    %155 = vmatpush2.bf16.msra.mxu0 0
    %156 = vmatprep.subr.bf16.mxu0 0
    %157 = vmatpush2.bf16.msra.mxu0 0
    %158 = vmatprep.subr.bf16.mxu0 0
    %159 = vmatpush2.bf16.msra.mxu0 0
    %160 = vmatprep.subr.bf16.mxu0 0
    %161 = vmatpush2.bf16.msra.mxu0 0
    %162 = vmatprep.subr.bf16.mxu0 0
    %163 = vmatpush2.bf16.msra.mxu0 0
    %164 = vmatprep.mubr.bf16.mxu0 0
    %165 = vmatmul.mubr.bf16.gmra.mxu0 %v82
    %v166 = vpop.f32.mrf.mxu0
    %v167 = vadd.f32 %v77, %v166
    %v168 = vpop.f32.mrf.mxu0
    %v169 = vpop.f32.mrf.mxu0
    %v170 = vadd.f32 %v77, %v169
    %v171 = vpop.f32.mrf.mxu0
    %172 = vdwg.mxu0
    %vm173 = vcmp.ge.f32.partialorder %v167, 0.0
    %vm174 = vcmp.ge.f32.partialorder %v170, 0.0
    %v175 = vmul.f32 %v167, 0.01
    %v176 = vmul.f32 %v170, 0.01
    %v177 = vsel %vm173, %v167, %v175
    %v178 = vsel %vm174, %v170, %v176
    %v179 = vadd.f32 %v177, %v178
    %v180 = vrot.slane %v179, 4
    %v181 = vadd.f32 %v179, %v180
    %v182 = vrot.slane %v181, 2
    %v183 = vadd.f32 %v181, %v182
    %v184 = vrot.slane %v183, 1
    %v185 = vadd.f32 %v183, %v184
    %v186 = vmul.f32 %v177, %v177
    %v187 = vmul.f32 %v178, %v178
    %v188 = vadd.f32 %v186, %v187
    %v189 = vrot.slane %v188, 4
    %v190 = vadd.f32 %v188, %v189
    %v191 = vrot.slane %v190, 2
    %v192 = vadd.f32 %v190, %v191
    %v193 = vrot.slane %v192, 1
    %v194 = vadd.f32 %v192, %v193
    %p195 = scmp.eq.s32.totalorder 0, 0
    // Predicated region
    $region26: #{tpu_custom_call.1} parent=1 // pred_check
      %p196 = pneg %p195
    $region27: #{tpu_custom_call.1} parent=1 // pred_check_branch
      %198 = sbr.rel (%p196) target = $region29
    $region28: #{tpu_custom_call.1} parent=1 // pred_region
      %199 = vst [vmem:[#allocation2] sm:$0x1] %v185
      %200 = vst [vmem:[#allocation3] sm:$0x1] %v194
    $region29: #{tpu_custom_call.1} parent=1 // pred_fallthru
      _
    %p201 = scmp.ne.s32.totalorder 0, 0
    // Predicated region
    $region30: #{tpu_custom_call.1} parent=1 // pred_check
      %p202 = pneg %p201
    $region31: #{tpu_custom_call.1} parent=1 // pred_check_branch
      %204 = sbr.rel (%p202) target = $region33
    $region32: #{tpu_custom_call.1} parent=1 // pred_region
      %v205 = vld [vmem:[#allocation2] sm:$0x1]
      %v206 = vadd.f32 %v205, %v185
      %207 = vst [vmem:[#allocation2] sm:$0x1] %v206
      %v208 = vld [vmem:[#allocation3] sm:$0x1]
      %v209 = vadd.f32 %v208, %v194
      %210 = vst [vmem:[#allocation3] sm:$0x1] %v209
    $region33: #{tpu_custom_call.1} parent=1 // pred_fallthru
      _
    // Predicated region
    $region34: #{tpu_custom_call.1} parent=1 // pred_check
      %p211 = pneg %p195
    $region35: #{tpu_custom_call.1} parent=1 // pred_check_branch
      %213 = sbr.rel (%p211) target = $region37
    $region36: #{tpu_custom_call.1} parent=1 // pred_region
      %v214 = vld [vmem:[#allocation2] sm:$0x1]
      %v215 = vld [vmem:[#allocation3] sm:$0x1]
      %vm216 = vcmp.ge.f32.partialorder %v55, 0.0
      %v217 = vmul.f32 %v55, 0.01
      %v218 = vsel %vm216, %v55, %v217
      %v219 = vmul.f32 %v218, 8.0
      %v220 = vsub.f32 %v214, %v219
      %v221 = vmul.f32 %v218, %v218
      %v222 = vmul.f32 %v221, 8.0
      %v223 = vsub.f32 %v215, %v222
      %v224 = vmul.f32 %v220, 0.125
      %v225 = vmul.f32 %v223, 0.125
      %v226 = vmul.f32 %v224, %v224
      %v227 = vsub.f32 %v225, %v226
      %v228 = vmax.f32 %v227, 0.0
      %v229 = vld [vmem:[#allocation9 + $0x1] sm:$0x1]
      %v230 = vadd.f32 %v228, 1e-05
      %v231 = vrsqrt.pop %v230
      %v232 = vmul.f32 %v229, %v231
      %233 = vst [vmem:[#allocation10] sm:$0x1] %v232
      %v234 = vld [vmem:[#allocation9 + $0x2] sm:$0x1]
      %v235 = vmul.f32 %v224, %v232
      %v236 = vsub.f32 %v234, %v235
      %237 = vst [vmem:[#allocation10 + $0x1] sm:$0x1] %v236
    $region37: #{tpu_custom_call.1} parent=1 // pred_fallthru
      _
    // Predicated region
    $region38: #{tpu_custom_call.1} parent=1 // pred_check
      _
    $region39: #{tpu_custom_call.1} parent=1 // pred_check_branch
      %239 = sbr.rel (0) target = $region41
    $region40: #{tpu_custom_call.1} parent=1 // pred_region
      %s241 = ssub.s32 32, 32
      %242 = vsyncadd [#allocation6], %s241
      %s244 = sshll.u32 [#allocation10], 4
      %s245 = int_to_ptr.vmem [resolvable:$true] %s244
      %247 = dma.vmem_to_hbm [thread:$0]  %s245, 32, %s3, [#allocation6]
    $region41: #{tpu_custom_call.1} parent=1 // pred_fallthru
      _
    // Predicated region
    $region42: #{tpu_custom_call.1} parent=1 // pred_check
      _
    $region43: #{tpu_custom_call.1} parent=1 // pred_check_branch
      %249 = sbr.rel (0) target = $region45
    $region44: #{tpu_custom_call.1} parent=1 // pred_region
      %250 = dma.done [#allocation6], 32
    $region45: #{tpu_custom_call.1} parent=1 // pred_fallthru
      _
    %251 = vsyncpa [#allocation5], 1
    %252 = vsyncpa [#allocation8], 1
    %253 = vsyncpa [#allocation6], 1

</llo_original>
